<compile_context>
chip_gen: v7x
topology: tpu7x:2x2x1
jax: 0.10.0
libtpu: 0.0.40
codegen_flags: <defaults>
</compile_context>

<pallas_src>
import functools

import jax
import jax.numpy as jnp
from jax.experimental import pallas as pl
from jax.experimental.pallas import tpu as pltpu

LANE = 128


def _round_up(n, m):
    return ((n + m - 1) // m) * m


def actor_kernel(x_ref, w1_ref, b1_ref, w2_ref, b2_ref, w3_ref, b3_ref, o_ref):
    # fc1: bf16 x @ bf16 W1 -> f32 accumulation on the MXU, f32 epilogue.
    h1 = jnp.dot(x_ref[...], w1_ref[...], preferred_element_type=jnp.float32)
    h1 = jnp.maximum(h1 + b1_ref[...], 0.0)

    # fc2: cast activations to bf16 for the MXU, keep f32 accumulation + epilogue.
    h2 = jnp.dot(h1.astype(jnp.bfloat16), w2_ref[...],
                 preferred_element_type=jnp.float32)
    h2 = jnp.maximum(h2 + b2_ref[...], 0.0)

    # fc3 (out_features == 1): VPU broadcast-multiply + XLU lane reduce instead of
    # an N=1 MXU matmul; w3 is stored as an f32 row [1, H2_pad].
    h3 = jnp.sum(h2 * w3_ref[...], axis=-1, keepdims=True) + b3_ref[...]  # [Bt, 1]
    y = jnp.tanh(h3)

    # Lane-dense store: broadcast the per-row scalar across the padded 128 output
    # lanes (unmasked vst); the wrapper slices column 0.
    o_ref[...] = jnp.broadcast_to(y, o_ref.shape).astype(o_ref.dtype)


@functools.partial(jax.jit, static_argnames=("b_tile",))
def actor_forward(x, params, *, b_tile=256):
    """x: [B, input_size] f32.  params: dict with w1,b1,w2,b2,w3,b3 (PyTorch-
    equivalent Linear params, weights already stored as [in_features, out_features])."""
    w1, b1, w2, b2, w3, b3 = (params[k] for k in ("w1", "b1", "w2", "b2", "w3", "b3"))
    B, in_size = x.shape
    h1_size, h2_size = w1.shape[1], w2.shape[1]
    out_size = w3.shape[1]
    assert out_size == 1, "fc3 VPU-reduce path assumes output_size == 1 (DDPG actor)"

    # Lane-dense padded sizes.
    in_pad = _round_up(in_size, LANE)      # e.g. 16  -> 128
    h1_pad = _round_up(h1_size, LANE)      # 400 -> 512
    h2_pad = _round_up(h2_size, LANE)      # 300 -> 384
    out_pad = LANE                         # output slab; column 0 is the real output

    # Batch tiling: tile must be a multiple of 8 (sublane); weights stay resident.
    bt = _round_up(min(b_tile, _round_up(B, 8)), 8)
    b_padded = _round_up(B, bt)
    grid = (b_padded // bt,)

    # Zero-pad + cast (zeros in padded lanes/rows contribute exactly 0 downstream).
    f32, bf16 = jnp.float32, jnp.bfloat16
    xp = jnp.zeros((b_padded, in_pad), bf16).at[:B, :in_size].set(x.astype(bf16))
    w1p = jnp.zeros((in_pad, h1_pad), bf16).at[:in_size, :h1_size].set(w1.astype(bf16))
    b1p = jnp.zeros((1, h1_pad), f32).at[:, :h1_size].set(b1.astype(f32))
    w2p = jnp.zeros((h1_pad, h2_pad), bf16).at[:h1_size, :h2_size].set(w2.astype(bf16))
    b2p = jnp.zeros((1, h2_pad), f32).at[:, :h2_size].set(b2.astype(f32))
    # fc3 weight as an f32 row [1, h2_pad] for the VPU/XLU path.
    w3p = jnp.zeros((1, h2_pad), f32).at[:, :h2_size].set(w3[:, 0].astype(f32)[None, :])
    b3p = b3.astype(f32).reshape(1, 1)

    # Advisory cost hint for XLA's scheduler around this small custom call.
    flops = 2 * B * (in_size * h1_size + h1_size * h2_size + h2_size * out_size)
    bytes_accessed = (b_padded * in_pad * 2            # x (bf16)
                      + in_pad * h1_pad * 2            # w1 (bf16)
                      + h1_pad * h2_pad * 2            # w2 (bf16)
                      + (h1_pad + h2_pad + h2_pad + 1) * 4   # biases + w3 row (f32)
                      + b_padded * out_pad * 4)        # output slab (f32)
    cost = pl.CostEstimate(flops=flops, transcendentals=B * out_size,
                           bytes_accessed=bytes_accessed)

    out_padded = pl.pallas_call(
        actor_kernel,
        out_shape=jax.ShapeDtypeStruct((b_padded, out_pad), jnp.float32),
        grid=grid,
        in_specs=[
            pl.BlockSpec((bt, in_pad), lambda i: (i, 0)),        # x: tiled over B
            pl.BlockSpec((in_pad, h1_pad), lambda i: (0, 0)),    # w1: VMEM-resident
            pl.BlockSpec((1, h1_pad), lambda i: (0, 0)),         # b1
            pl.BlockSpec((h1_pad, h2_pad), lambda i: (0, 0)),    # w2
            pl.BlockSpec((1, h2_pad), lambda i: (0, 0)),         # b2
            pl.BlockSpec((1, h2_pad), lambda i: (0, 0)),         # w3 (row)
            pl.BlockSpec((1, 1), lambda i: (0, 0)),              # b3 (scalar)
        ],
        out_specs=pl.BlockSpec((bt, out_pad), lambda i: (i, 0)),
        compiler_params=pltpu.CompilerParams(
            dimension_semantics=("parallel",)),                  # 2x on v7x (2 TCs)
        cost_estimate=cost,
    )(xp, w1p, b1p, w2p, b2p, w3p, b3p)

    # Strip batch padding and the lane padding of the output slab.
    return out_padded[:B, :out_size]


def init_params(key, input_size, output_size):
    """Deterministic init matching nn.Linear's U(-1/sqrt(fan_in), 1/sqrt(fan_in)).
    Weights stored transposed vs PyTorch: [in_features, out_features]."""
    dims = [(input_size, 400), (400, 300), (300, output_size)]
    params = {}
    keys = jax.random.split(key, 2 * len(dims))
    for i, (fan_in, fan_out) in enumerate(dims):
        bound = 1.0 / jnp.sqrt(fan_in)
        params[f"w{i+1}"] = jax.random.uniform(
            keys[2 * i], (fan_in, fan_out), jnp.float32, -bound, bound)
        params[f"b{i+1}"] = jax.random.uniform(
            keys[2 * i + 1], (1, fan_out), jnp.float32, -bound, bound)
    return params


def reference_forward(x, params):
    h1 = jnp.maximum(x @ params["w1"] + params["b1"], 0.0)
    h2 = jnp.maximum(h1 @ params["w2"] + params["b2"], 0.0)
    return jnp.tanh(h2 @ params["w3"] + params["b3"])


if __name__ == "__main__":
    key = jax.random.PRNGKey(0)
    k_param, k_x = jax.random.split(key)

    batch = 8
    input_size = 16   # stands in for X_train.shape[1]
    output_size = 1

    params = init_params(k_param, input_size, output_size)
    x = jax.random.normal(k_x, (batch, input_size), jnp.float32)

    out = actor_forward(x, params)
    out = jax.block_until_ready(out)

    ref = reference_forward(x, params)
    assert out.shape == (batch, output_size)
    # Tolerance loosened for bf16 matmul inputs (accumulation stays f32).
    assert jnp.allclose(out, ref, atol=2e-2, rtol=2e-2), "mismatch vs JAX reference"
    print("KERNEL_OK")
</pallas_src>

<mosaic_0001>
module attributes {stable_mosaic.version = 11 : i64} {
  func.func @actor_kernel(%arg0: i32, %arg1: memref<8x128xbf16, #tpu.memory_space<vmem>>, %arg2: memref<128x512xbf16, #tpu.memory_space<vmem>>, %arg3: memref<1x512xf32, #tpu.memory_space<vmem>>, %arg4: memref<512x384xbf16, #tpu.memory_space<vmem>>, %arg5: memref<1x384xf32, #tpu.memory_space<vmem>>, %arg6: memref<1x384xf32, #tpu.memory_space<vmem>>, %arg7: memref<1x1xf32, #tpu.memory_space<vmem>>, %arg8: memref<8x128xf32, #tpu.memory_space<vmem>>) attributes {dimension_semantics = [#tpu.dimension_semantics<parallel>], iteration_bounds = array<i64: 1>, scalar_prefetch = 0 : i64, scratch_operands = 0 : i64, tpu.core_type = #tpu.core_type<tc>, window_params = [{transform_indices = @transform_0, window_bounds = array<i64: 8, 128>}, {pipeline_mode = #tpu.pipeline_mode<synchronous>, transform_indices = @transform_1, window_bounds = array<i64: 128, 512>}, {pipeline_mode = #tpu.pipeline_mode<synchronous>, transform_indices = @transform_2, window_bounds = array<i64: 1, 512>}, {pipeline_mode = #tpu.pipeline_mode<synchronous>, transform_indices = @transform_3, window_bounds = array<i64: 512, 384>}, {pipeline_mode = #tpu.pipeline_mode<synchronous>, transform_indices = @transform_4, window_bounds = array<i64: 1, 384>}, {pipeline_mode = #tpu.pipeline_mode<synchronous>, transform_indices = @transform_5, window_bounds = array<i64: 1, 384>}, {pipeline_mode = #tpu.pipeline_mode<synchronous>, transform_indices = @transform_6, window_bounds = array<i64: 1, 1>}, {transform_indices = @transform_7, window_bounds = array<i64: 8, 128>}]} {
    %c0 = arith.constant 0 : index
    %c0_0 = arith.constant 0 : index
    %0 = vector.load %arg1[%c0, %c0_0] : memref<8x128xbf16, #tpu.memory_space<vmem>>, vector<8x128xbf16>
    %c0_1 = arith.constant 0 : index
    %c0_2 = arith.constant 0 : index
    %1 = vector.load %arg2[%c0_1, %c0_2] : memref<128x512xbf16, #tpu.memory_space<vmem>>, vector<128x512xbf16>
    %cst = arith.constant dense<0.000000e+00> : vector<8x512xf32>
    %2 = tpu.matmul %0, %1, %cst {dimension_numbers = #tpu.dot_dimension_numbers<[1], [0], [0], [1], [0, 0, 1, 1], [], []>} : vector<8x128xbf16>, vector<128x512xbf16>, vector<8x512xf32> -> vector<8x512xf32>
    %c0_3 = arith.constant 0 : index
    %c0_4 = arith.constant 0 : index
    %3 = vector.load %arg3[%c0_3, %c0_4] : memref<1x512xf32, #tpu.memory_space<vmem>>, vector<1x512xf32>
    %4 = vector.broadcast %3 : vector<1x512xf32> to vector<8x512xf32>
    %5 = arith.addf %2, %4 : vector<8x512xf32>
    %cst_5 = arith.constant 0.000000e+00 : f32
    %6 = vector.broadcast %cst_5 : f32 to vector<8x512xf32>
    %7 = arith.maximumf %5, %6 : vector<8x512xf32>
    %8 = arith.truncf %7 : vector<8x512xf32> to vector<8x512xbf16>
    %c0_6 = arith.constant 0 : index
    %c0_7 = arith.constant 0 : index
    %9 = vector.load %arg4[%c0_6, %c0_7] : memref<512x384xbf16, #tpu.memory_space<vmem>>, vector<512x384xbf16>
    %cst_8 = arith.constant dense<0.000000e+00> : vector<8x384xf32>
    %10 = tpu.matmul %8, %9, %cst_8 {dimension_numbers = #tpu.dot_dimension_numbers<[1], [0], [0], [1], [0, 0, 1, 1], [], []>} : vector<8x512xbf16>, vector<512x384xbf16>, vector<8x384xf32> -> vector<8x384xf32>
    %c0_9 = arith.constant 0 : index
    %c0_10 = arith.constant 0 : index
    %11 = vector.load %arg5[%c0_9, %c0_10] : memref<1x384xf32, #tpu.memory_space<vmem>>, vector<1x384xf32>
    %12 = vector.broadcast %11 : vector<1x384xf32> to vector<8x384xf32>
    %13 = arith.addf %10, %12 : vector<8x384xf32>
    %cst_11 = arith.constant 0.000000e+00 : f32
    %14 = vector.broadcast %cst_11 : f32 to vector<8x384xf32>
    %15 = arith.maximumf %13, %14 : vector<8x384xf32>
    %c0_12 = arith.constant 0 : index
    %c0_13 = arith.constant 0 : index
    %16 = vector.load %arg6[%c0_12, %c0_13] : memref<1x384xf32, #tpu.memory_space<vmem>>, vector<1x384xf32>
    %17 = vector.broadcast %16 : vector<1x384xf32> to vector<8x384xf32>
    %18 = arith.mulf %15, %17 : vector<8x384xf32>
    %cst_14 = arith.constant dense<0.000000e+00> : vector<8xf32>
    %19 = vector.multi_reduction <add>, %18, %cst_14 [1] : vector<8x384xf32> to vector<8xf32>
    %20 = vector.shape_cast %19 : vector<8xf32> to vector<8x1xf32>
    %c0_15 = arith.constant 0 : index
    %c0_16 = arith.constant 0 : index
    %21 = vector.load %arg7[%c0_15, %c0_16] : memref<1x1xf32, #tpu.memory_space<vmem>>, vector<1x1xf32>
    %22 = vector.broadcast %21 : vector<1x1xf32> to vector<8x1xf32>
    %23 = arith.addf %20, %22 : vector<8x1xf32>
    %24 = math.tanh %23 : vector<8x1xf32>
    %25 = vector.shape_cast %24 : vector<8x1xf32> to vector<8x1xf32>
    %26 = vector.broadcast %25 : vector<8x1xf32> to vector<8x128xf32>
    %c0_17 = arith.constant 0 : index
    %c0_18 = arith.constant 0 : index
    %27 = vector.load %arg8[%c0_17, %c0_18] : memref<8x128xf32, #tpu.memory_space<vmem>>, vector<8x128xf32>
    tpu.vector_store %arg8[%c0_17, %c0_18], %26 {strides = array<i32>} : memref<8x128xf32, #tpu.memory_space<vmem>>, vector<8x128xf32>,
    return
  }
  func.func @transform_0(%arg0: i32) -> (i32, i32) {
    %c0_i32 = arith.constant 0 : i32
    %c0_i32_0 = arith.constant 0 : i32
    return %arg0, %c0_i32 : i32, i32
  }
  func.func @transform_1(%arg0: i32) -> (i32, i32) {
    %c0_i32 = arith.constant 0 : i32
    %c0_i32_0 = arith.constant 0 : i32
    %c0_i32_1 = arith.constant 0 : i32
    return %c0_i32, %c0_i32_0 : i32, i32
  }
  func.func @transform_2(%arg0: i32) -> (i32, i32) {
    %c0_i32 = arith.constant 0 : i32
    %c0_i32_0 = arith.constant 0 : i32
    %c0_i32_1 = arith.constant 0 : i32
    return %c0_i32, %c0_i32_0 : i32, i32
  }
  func.func @transform_3(%arg0: i32) -> (i32, i32) {
    %c0_i32 = arith.constant 0 : i32
    %c0_i32_0 = arith.constant 0 : i32
    %c0_i32_1 = arith.constant 0 : i32
    return %c0_i32, %c0_i32_0 : i32, i32
  }
  func.func @transform_4(%arg0: i32) -> (i32, i32) {
    %c0_i32 = arith.constant 0 : i32
    %c0_i32_0 = arith.constant 0 : i32
    %c0_i32_1 = arith.constant 0 : i32
    return %c0_i32, %c0_i32_0 : i32, i32
  }
  func.func @transform_5(%arg0: i32) -> (i32, i32) {
    %c0_i32 = arith.constant 0 : i32
    %c0_i32_0 = arith.constant 0 : i32
    %c0_i32_1 = arith.constant 0 : i32
    return %c0_i32, %c0_i32_0 : i32, i32
  }
  func.func @transform_6(%arg0: i32) -> (i32, i32) {
    %c0_i32 = arith.constant 0 : i32
    %c0_i32_0 = arith.constant 0 : i32
    %c0_i32_1 = arith.constant 0 : i32
    return %c0_i32, %c0_i32_0 : i32, i32
  }
  func.func @transform_7(%arg0: i32) -> (i32, i32) {
    %c0_i32 = arith.constant 0 : i32
    %c0_i32_0 = arith.constant 0 : i32
    return %arg0, %c0_i32 : i32, i32
  }
}

</mosaic_0001>

<llo_original>
// kernel: actor_forward.1
$region0: #{actor_forward.1}
  #allocation0 [shape = 'u32[]', space=smem, size = 0x4, offset = 0x4, fixed_abs, tag = 'smem constant byte address 0x4 - core index']
  #allocation1 [shape = 'u32[144,128]{1,0:T(1,128)}', space=vmem, size = 0x12000, scoped, tag = 'internal scratch']
  #allocation2 [shape = 'f32[1,1]{1,0:T(1,128)S(1)}', space=vmem, size = 0x200, scoped, tag = 'scoped memory for actor_forward.1']
  %s0 = inlined_call_operand.vmem [shape: bf16[8,128], index: 0, kind: input, shape index: {}]
  %s1 = inlined_call_operand.vmem [shape: bf16[128,512], index: 1, kind: input, shape index: {}]
  %s2 = inlined_call_operand.vmem [shape: f32[1,512], index: 2, kind: input, shape index: {}]
  %s3 = inlined_call_operand.vmem [shape: bf16[512,384], index: 3, kind: input, shape index: {}]
  %s4 = inlined_call_operand.vmem [shape: f32[1,384], index: 4, kind: input, shape index: {}]
  %s5 = inlined_call_operand.vmem [shape: f32[1,384], index: 5, kind: input, shape index: {}]
  %s6 = inlined_call_operand.<no memory space> [shape: f32[1,1], index: 6, kind: input, shape index: {}]
  %s7 = inlined_call_operand.vmem [shape: f32[8,128], index: 7, kind: output, shape index: {}]
  %s8 = sld [smem:[#allocation0]]
  $region38: #{actor_forward.1} parent=0
    _
  %s10 = ssub.s32 1, %s8
  %s11 = scalar_select 0, %s10, %s8
  %v12 = vstv %s6
  %13 = vst [vmem:[#allocation2] sm:$0x1] %v12
  // Predicated region
  $region2: #{actor_forward.1} parent=0 // pred_check
    _
  $region3: #{actor_forward.1} parent=0 // pred_check_branch
    %15 = sbr.rel (0) target = $region5
  $region4: #{actor_forward.1} parent=0 // pred_region
    _
  $region5: #{actor_forward.1} parent=0 // pred_fallthru
    _
  // Predicated region
  $region6: #{actor_forward.1} parent=0 // pred_check
    _
  $region7: #{actor_forward.1} parent=0 // pred_check_branch
    %17 = sbr.rel (0) target = $region9
  $region8: #{actor_forward.1} parent=0 // pred_region
    _
  $region9: #{actor_forward.1} parent=0 // pred_fallthru
    _
  // Predicated region
  $region10: #{actor_forward.1} parent=0 // pred_check
    _
  $region11: #{actor_forward.1} parent=0 // pred_check_branch
    %19 = sbr.rel (0) target = $region13
  $region12: #{actor_forward.1} parent=0 // pred_region
    _
  $region13: #{actor_forward.1} parent=0 // pred_fallthru
    _
  // Predicated region
  $region14: #{actor_forward.1} parent=0 // pred_check
    _
  $region15: #{actor_forward.1} parent=0 // pred_check_branch
    %21 = sbr.rel (0) target = $region17
  $region16: #{actor_forward.1} parent=0 // pred_region
    _
  $region17: #{actor_forward.1} parent=0 // pred_fallthru
    _
  // Predicated region
  $region18: #{actor_forward.1} parent=0 // pred_check
    _
  $region19: #{actor_forward.1} parent=0 // pred_check_branch
    %23 = sbr.rel (0) target = $region21
  $region20: #{actor_forward.1} parent=0 // pred_region
    _
  $region21: #{actor_forward.1} parent=0 // pred_fallthru
    _
  // Predicated region
  $region22: #{actor_forward.1} parent=0 // pred_check
    _
  $region23: #{actor_forward.1} parent=0 // pred_check_branch
    %25 = sbr.rel (0) target = $region25
  $region24: #{actor_forward.1} parent=0 // pred_region
    _
  $region25: #{actor_forward.1} parent=0 // pred_fallthru
    _
  // Predicated region
  $region26: #{actor_forward.1} parent=0 // pred_check
    _
  $region27: #{actor_forward.1} parent=0 // pred_check_branch
    %27 = sbr.rel (0) target = $region29
  $region28: #{actor_forward.1} parent=0 // pred_region
    _
  $region29: #{actor_forward.1} parent=0 // pred_fallthru
    _
  %v29 = vld [vmem:[%s0] sm:$0xf]
  %v30 = vld [vmem:[%s1] sm:$0xff]
  %v31 = vld [vmem:[%s1 + $0x8] sm:$0xff]
  %v32 = vld [vmem:[%s1 + $0x10] sm:$0xff]
  %v33 = vld [vmem:[%s1 + $0x18] sm:$0xff]
  %v34 = vld [vmem:[%s1 + $0x20] sm:$0xff]
  %v35 = vld [vmem:[%s1 + $0x28] sm:$0xff]
  %v36 = vld [vmem:[%s1 + $0x30] sm:$0xff]
  %v37 = vld [vmem:[%s1 + $0x38] sm:$0xff]
  %v38 = vld [vmem:[%s1 + $0x40] sm:$0xff]
  %v39 = vld [vmem:[%s1 + $0x48] sm:$0xff]
  %v40 = vld [vmem:[%s1 + $0x50] sm:$0xff]
  %v41 = vld [vmem:[%s1 + $0x58] sm:$0xff]
  %v42 = vld [vmem:[%s1 + $0x60] sm:$0xff]
  %v43 = vld [vmem:[%s1 + $0x68] sm:$0xff]
  %v44 = vld [vmem:[%s1 + $0x70] sm:$0xff]
  %v45 = vld [vmem:[%s1 + $0x78] sm:$0xff]
  %v46 = vld [vmem:[%s1 + $0x80] sm:$0xff]
  %v47 = vld [vmem:[%s1 + $0x88] sm:$0xff]
  %v48 = vld [vmem:[%s1 + $0x90] sm:$0xff]
  %v49 = vld [vmem:[%s1 + $0x98] sm:$0xff]
  %v50 = vld [vmem:[%s1 + $0xa0] sm:$0xff]
  %v51 = vld [vmem:[%s1 + $0xa8] sm:$0xff]
  %v52 = vld [vmem:[%s1 + $0xb0] sm:$0xff]
  %v53 = vld [vmem:[%s1 + $0xb8] sm:$0xff]
  %v54 = vld [vmem:[%s1 + $0xc0] sm:$0xff]
  %v55 = vld [vmem:[%s1 + $0xc8] sm:$0xff]
  %v56 = vld [vmem:[%s1 + $0xd0] sm:$0xff]
  %v57 = vld [vmem:[%s1 + $0xd8] sm:$0xff]
  %v58 = vld [vmem:[%s1 + $0xe0] sm:$0xff]
  %v59 = vld [vmem:[%s1 + $0xe8] sm:$0xff]
  %v60 = vld [vmem:[%s1 + $0xf0] sm:$0xff]
  %v61 = vld [vmem:[%s1 + $0xf8] sm:$0xff]
  %v62 = vld [vmem:[%s2] sm:$0xf]
  %v64 = vlaneseq
  %v65 = vshrl.u32 %v64, 7
  %v66 = vsub.s32 0, %v65
  %v67 = vrot.slane %v62, %v66
  %v68 = vlaneseq
  %v69 = vshrl.u32 %v68, 7
  %v70 = vsub.s32 1, %v69
  %v71 = vrot.slane %v62, %v70
  %v72 = vlaneseq
  %v73 = vshrl.u32 %v72, 7
  %v74 = vsub.s32 2, %v73
  %v75 = vrot.slane %v62, %v74
  %v76 = vlaneseq
  %v77 = vshrl.u32 %v76, 7
  %v78 = vsub.s32 3, %v77
  %v79 = vrot.slane %v62, %v78
  %v116 = vunpack.c.l.b16 %v30
  %v117 = vunpack.c.h.b16 %v30
  %v118 = vunpack.c.l.b16 %v31
  %v119 = vunpack.c.h.b16 %v31
  %v120 = vunpack.c.l.b16 %v32
  %v121 = vunpack.c.h.b16 %v32
  %v122 = vunpack.c.l.b16 %v33
  %v123 = vunpack.c.h.b16 %v33
  %v124 = vunpack.c.l.b16 %v34
  %v125 = vunpack.c.h.b16 %v34
  %v126 = vunpack.c.l.b16 %v35
  %v127 = vunpack.c.h.b16 %v35
  %v128 = vunpack.c.l.b16 %v36
  %v129 = vunpack.c.h.b16 %v36
  %v130 = vunpack.c.l.b16 %v37
  %v131 = vunpack.c.h.b16 %v37
  %v132 = vunpack.c.l.b16 %v38
  %v133 = vunpack.c.h.b16 %v38
  %v134 = vunpack.c.l.b16 %v39
  %v135 = vunpack.c.h.b16 %v39
  %v136 = vunpack.c.l.b16 %v40
  %v137 = vunpack.c.h.b16 %v40
  %v138 = vunpack.c.l.b16 %v41
  %v139 = vunpack.c.h.b16 %v41
  %v140 = vunpack.c.l.b16 %v42
  %v141 = vunpack.c.h.b16 %v42
  %v142 = vunpack.c.l.b16 %v43
  %v143 = vunpack.c.h.b16 %v43
  %v144 = vunpack.c.l.b16 %v44
  %v145 = vunpack.c.h.b16 %v44
  %v146 = vunpack.c.l.b16 %v45
  %v147 = vunpack.c.h.b16 %v45
  %v148 = vunpack.c.l.b16 %v46
  %v149 = vunpack.c.h.b16 %v46
  %v150 = vunpack.c.l.b16 %v47
  %v151 = vunpack.c.h.b16 %v47
  %v152 = vunpack.c.l.b16 %v48
  %v153 = vunpack.c.h.b16 %v48
  %v154 = vunpack.c.l.b16 %v49
  %v155 = vunpack.c.h.b16 %v49
  %v156 = vunpack.c.l.b16 %v50
  %v157 = vunpack.c.h.b16 %v50
  %v158 = vunpack.c.l.b16 %v51
  %v159 = vunpack.c.h.b16 %v51
  %v160 = vunpack.c.l.b16 %v52
  %v161 = vunpack.c.h.b16 %v52
  %v162 = vunpack.c.l.b16 %v53
  %v163 = vunpack.c.h.b16 %v53
  %v164 = vunpack.c.l.b16 %v54
  %v165 = vunpack.c.h.b16 %v54
  %v166 = vunpack.c.l.b16 %v55
  %v167 = vunpack.c.h.b16 %v55
  %v168 = vunpack.c.l.b16 %v56
  %v169 = vunpack.c.h.b16 %v56
  %v170 = vunpack.c.l.b16 %v57
  %v171 = vunpack.c.h.b16 %v57
  %v172 = vunpack.c.l.b16 %v58
  %v173 = vunpack.c.h.b16 %v58
  %v174 = vunpack.c.l.b16 %v59
  %v175 = vunpack.c.h.b16 %v59
  %v176 = vunpack.c.l.b16 %v60
  %v177 = vunpack.c.h.b16 %v60
  %v178 = vunpack.c.l.b16 %v61
  %v179 = vunpack.c.h.b16 %v61
  %v180 = vpack.c.b16 %v120, %v116
  %v181 = vpack.c.b16 %v121, %v117
  %v182 = vpack.c.b16 %v122, %v118
  %v183 = vpack.c.b16 %v123, %v119
  %v184 = vpack.c.b16 %v128, %v124
  %v185 = vpack.c.b16 %v129, %v125
  %v186 = vpack.c.b16 %v130, %v126
  %v187 = vpack.c.b16 %v131, %v127
  %v188 = vpack.c.b16 %v136, %v132
  %v189 = vpack.c.b16 %v137, %v133
  %v190 = vpack.c.b16 %v138, %v134
  %v191 = vpack.c.b16 %v139, %v135
  %v192 = vpack.c.b16 %v144, %v140
  %v193 = vpack.c.b16 %v145, %v141
  %v194 = vpack.c.b16 %v146, %v142
  %v195 = vpack.c.b16 %v147, %v143
  %v196 = vpack.c.b16 %v152, %v148
  %v197 = vpack.c.b16 %v153, %v149
  %v198 = vpack.c.b16 %v154, %v150
  %v199 = vpack.c.b16 %v155, %v151
  %v200 = vpack.c.b16 %v160, %v156
  %v201 = vpack.c.b16 %v161, %v157
  %v202 = vpack.c.b16 %v162, %v158
  %v203 = vpack.c.b16 %v163, %v159
  %v204 = vpack.c.b16 %v168, %v164
  %v205 = vpack.c.b16 %v169, %v165
  %v206 = vpack.c.b16 %v170, %v166
  %v207 = vpack.c.b16 %v171, %v167
  %v208 = vpack.c.b16 %v176, %v172
  %v209 = vpack.c.b16 %v177, %v173
  %v210 = vpack.c.b16 %v178, %v174
  %v211 = vpack.c.b16 %v179, %v175
  %244 = vmatprep.subr.bf16.mxu0 %v181
  %245 = vmatpush1.bf16.msra.mxu0 %v180
  %246 = vmatprep.subr.bf16.mxu0 %v185
  %247 = vmatpush1.bf16.msra.mxu0 %v184
  %248 = vmatprep.subr.bf16.mxu0 %v189
  %249 = vmatpush1.bf16.msra.mxu0 %v188
  %250 = vmatprep.subr.bf16.mxu0 %v193
  %251 = vmatpush1.bf16.msra.mxu0 %v192
  %252 = vmatprep.subr.bf16.mxu0 %v197
  %253 = vmatpush1.bf16.msra.mxu0 %v196
  %254 = vmatprep.subr.bf16.mxu0 %v201
  %255 = vmatpush1.bf16.msra.mxu0 %v200
  %256 = vmatprep.subr.bf16.mxu0 %v205
  %257 = vmatpush1.bf16.msra.mxu0 %v204
  %258 = vmatprep.subr.bf16.mxu0 %v209
  %259 = vmatpush1.bf16.msra.mxu0 %v208
  %260 = vmatprep.subr.bf16.mxu0 0
  %261 = vmatpush1.bf16.msra.mxu0 0
  %262 = vmatprep.subr.bf16.mxu0 0
  %263 = vmatpush1.bf16.msra.mxu0 0
  %264 = vmatprep.subr.bf16.mxu0 0
  %265 = vmatpush1.bf16.msra.mxu0 0
  %266 = vmatprep.subr.bf16.mxu0 0
  %267 = vmatpush1.bf16.msra.mxu0 0
  %268 = vmatprep.subr.bf16.mxu0 0
  %269 = vmatpush1.bf16.msra.mxu0 0
  %270 = vmatprep.subr.bf16.mxu0 0
  %271 = vmatpush1.bf16.msra.mxu0 0
  %272 = vmatprep.subr.bf16.mxu0 0
  %273 = vmatpush1.bf16.msra.mxu0 0
  %274 = vmatprep.subr.bf16.mxu0 0
  %275 = vmatpush1.bf16.msra.mxu0 0
  %276 = vmatprep.mubr.bf16.mxu0 0
  %277 = vmatmul.mubr.bf16.gmra.mrb[0].mxu0 %v29
  %v278 = vpop.f32.mrb[0].mxu0
  %v279 = vadd.f32 %v67, %v278
  %v280 = vpop.f32.mrb[0].mxu0
  %v281 = vadd.f32 %v71, %v280
  %v282 = vpop.f32.mrb[0].mxu0
  %v283 = vpop.f32.mrb[0].mxu0
  %284 = vdwg.mxu0
  %285 = vmatprep.subr.bf16.mxu0 %v183
  %286 = vmatpush1.bf16.msra.mxu0 %v182
  %287 = vmatprep.subr.bf16.mxu0 %v187
  %288 = vmatpush1.bf16.msra.mxu0 %v186
  %289 = vmatprep.subr.bf16.mxu0 %v191
  %290 = vmatpush1.bf16.msra.mxu0 %v190
  %291 = vmatprep.subr.bf16.mxu0 %v195
  %292 = vmatpush1.bf16.msra.mxu0 %v194
  %293 = vmatprep.subr.bf16.mxu0 %v199
  %294 = vmatpush1.bf16.msra.mxu0 %v198
  %295 = vmatprep.subr.bf16.mxu0 %v203
  %296 = vmatpush1.bf16.msra.mxu0 %v202
  %297 = vmatprep.subr.bf16.mxu0 %v207
  %298 = vmatpush1.bf16.msra.mxu0 %v206
  %299 = vmatprep.subr.bf16.mxu0 %v211
  %300 = vmatpush1.bf16.msra.mxu0 %v210
  %301 = vmatprep.subr.bf16.mxu0 0
  %302 = vmatpush1.bf16.msra.mxu0 0
  %303 = vmatprep.subr.bf16.mxu0 0
  %304 = vmatpush1.bf16.msra.mxu0 0
  %305 = vmatprep.subr.bf16.mxu0 0
  %306 = vmatpush1.bf16.msra.mxu0 0
  %307 = vmatprep.subr.bf16.mxu0 0
  %308 = vmatpush1.bf16.msra.mxu0 0
  %309 = vmatprep.subr.bf16.mxu0 0
  %310 = vmatpush1.bf16.msra.mxu0 0
  %311 = vmatprep.subr.bf16.mxu0 0
  %312 = vmatpush1.bf16.msra.mxu0 0
  %313 = vmatprep.subr.bf16.mxu0 0
  %314 = vmatpush1.bf16.msra.mxu0 0
  %315 = vmatprep.subr.bf16.mxu0 0
  %316 = vmatpush1.bf16.msra.mxu0 0
  %317 = vmatprep.mubr.bf16.mxu0 0
  %318 = vmatmul.mubr.bf16.gmra.mrb[0].mxu0 %v29
  %v319 = vpop.f32.mrb[0].mxu0
  %v320 = vadd.f32 %v75, %v319
  %v321 = vpop.f32.mrb[0].mxu0
  %v322 = vadd.f32 %v79, %v321
  %v323 = vpop.f32.mrb[0].mxu0
  %v324 = vpop.f32.mrb[0].mxu0
  %325 = vdwg.mxu0
  %v326 = vmax.f32 %v279, 0.0
  %v327 = vmax.f32 %v281, 0.0
  %v328 = vmax.f32 %v320, 0.0
  %v329 = vmax.f32 %v322, 0.0
  %v330 = vpack.c.bf16 %v326, %v326
  %v331 = vpack.c.bf16 %v327, %v327
  %v332 = vpack.c.bf16 %v328, %v328
  %v333 = vpack.c.bf16 %v329, %v329
  %v334 = vld [vmem:[%s3] sm:$0xff]
  %v335 = vld [vmem:[%s3 + $0x8] sm:$0xf]
  %v336 = vld [vmem:[%s3 + $0xc] sm:$0xff]
  %v337 = vld [vmem:[%s3 + $0x14] sm:$0xf]
  %v338 = vld [vmem:[%s3 + $0x18] sm:$0xff]
  %v339 = vld [vmem:[%s3 + $0x20] sm:$0xf]
  %v340 = vld [vmem:[%s3 + $0x24] sm:$0xff]
  %v341 = vld [vmem:[%s3 + $0x2c] sm:$0xf]
  %v342 = vld [vmem:[%s3 + $0x30] sm:$0xff]
  %v343 = vld [vmem:[%s3 + $0x38] sm:$0xf]
  %v344 = vld [vmem:[%s3 + $0x3c] sm:$0xff]
  %v345 = vld [vmem:[%s3 + $0x44] sm:$0xf]
  %v346 = vld [vmem:[%s3 + $0x48] sm:$0xff]
  %v347 = vld [vmem:[%s3 + $0x50] sm:$0xf]
  %v348 = vld [vmem:[%s3 + $0x54] sm:$0xff]
  %v349 = vld [vmem:[%s3 + $0x5c] sm:$0xf]
  %v350 = vld [vmem:[%s3 + $0x60] sm:$0xff]
  %v351 = vld [vmem:[%s3 + $0x68] sm:$0xf]
  %v352 = vld [vmem:[%s3 + $0x6c] sm:$0xff]
  %v353 = vld [vmem:[%s3 + $0x74] sm:$0xf]
  %v354 = vld [vmem:[%s3 + $0x78] sm:$0xff]
  %v355 = vld [vmem:[%s3 + $0x80] sm:$0xf]
  %v356 = vld [vmem:[%s3 + $0x84] sm:$0xff]
  %v357 = vld [vmem:[%s3 + $0x8c] sm:$0xf]
  %v358 = vld [vmem:[%s3 + $0x90] sm:$0xff]
  %v359 = vld [vmem:[%s3 + $0x98] sm:$0xf]
  %v360 = vld [vmem:[%s3 + $0x9c] sm:$0xff]
  %v361 = vld [vmem:[%s3 + $0xa4] sm:$0xf]
  %v362 = vld [vmem:[%s3 + $0xa8] sm:$0xff]
  %v363 = vld [vmem:[%s3 + $0xb0] sm:$0xf]
  %v364 = vld [vmem:[%s3 + $0xb4] sm:$0xff]
  %v365 = vld [vmem:[%s3 + $0xbc] sm:$0xf]
  %v366 = vld [vmem:[%s3 + $0xc0] sm:$0xff]
  %v367 = vld [vmem:[%s3 + $0xc8] sm:$0xf]
  %v368 = vld [vmem:[%s3 + $0xcc] sm:$0xff]
  %v369 = vld [vmem:[%s3 + $0xd4] sm:$0xf]
  %v370 = vld [vmem:[%s3 + $0xd8] sm:$0xff]
  %v371 = vld [vmem:[%s3 + $0xe0] sm:$0xf]
  %v372 = vld [vmem:[%s3 + $0xe4] sm:$0xff]
  %v373 = vld [vmem:[%s3 + $0xec] sm:$0xf]
  %v374 = vld [vmem:[%s3 + $0xf0] sm:$0xff]
  %v375 = vld [vmem:[%s3 + $0xf8] sm:$0xf]
  %v376 = vld [vmem:[%s3 + $0xfc] sm:$0xff]
  %v377 = vld [vmem:[%s3 + $0x104] sm:$0xf]
  %v378 = vld [vmem:[%s3 + $0x108] sm:$0xff]
  %v379 = vld [vmem:[%s3 + $0x110] sm:$0xf]
  %v380 = vld [vmem:[%s3 + $0x114] sm:$0xff]
  %v381 = vld [vmem:[%s3 + $0x11c] sm:$0xf]
  %v382 = vld [vmem:[%s3 + $0x120] sm:$0xff]
  %v383 = vld [vmem:[%s3 + $0x128] sm:$0xf]
  %v384 = vld [vmem:[%s3 + $0x12c] sm:$0xff]
  %v385 = vld [vmem:[%s3 + $0x134] sm:$0xf]
  %v386 = vld [vmem:[%s3 + $0x138] sm:$0xff]
  %v387 = vld [vmem:[%s3 + $0x140] sm:$0xf]
  %v388 = vld [vmem:[%s3 + $0x144] sm:$0xff]
  %v389 = vld [vmem:[%s3 + $0x14c] sm:$0xf]
  %v390 = vld [vmem:[%s3 + $0x150] sm:$0xff]
  %v391 = vld [vmem:[%s3 + $0x158] sm:$0xf]
  %v392 = vld [vmem:[%s3 + $0x15c] sm:$0xff]
  %v393 = vld [vmem:[%s3 + $0x164] sm:$0xf]
  %v394 = vld [vmem:[%s3 + $0x168] sm:$0xff]
  %v395 = vld [vmem:[%s3 + $0x170] sm:$0xf]
  %v396 = vld [vmem:[%s3 + $0x174] sm:$0xff]
  %v397 = vld [vmem:[%s3 + $0x17c] sm:$0xf]
  %v398 = vld [vmem:[%s3 + $0x180] sm:$0xff]
  %v399 = vld [vmem:[%s3 + $0x188] sm:$0xf]
  %v400 = vld [vmem:[%s3 + $0x18c] sm:$0xff]
  %v401 = vld [vmem:[%s3 + $0x194] sm:$0xf]
  %v402 = vld [vmem:[%s3 + $0x198] sm:$0xff]
  %v403 = vld [vmem:[%s3 + $0x1a0] sm:$0xf]
  %v404 = vld [vmem:[%s3 + $0x1a4] sm:$0xff]
  %v405 = vld [vmem:[%s3 + $0x1ac] sm:$0xf]
  %v406 = vld [vmem:[%s3 + $0x1b0] sm:$0xff]
  %v407 = vld [vmem:[%s3 + $0x1b8] sm:$0xf]
  %v408 = vld [vmem:[%s3 + $0x1bc] sm:$0xff]
  %v409 = vld [vmem:[%s3 + $0x1c4] sm:$0xf]
  %v410 = vld [vmem:[%s3 + $0x1c8] sm:$0xff]
  %v411 = vld [vmem:[%s3 + $0x1d0] sm:$0xf]
  %v412 = vld [vmem:[%s3 + $0x1d4] sm:$0xff]
  %v413 = vld [vmem:[%s3 + $0x1dc] sm:$0xf]
  %v414 = vld [vmem:[%s3 + $0x1e0] sm:$0xff]
  %v415 = vld [vmem:[%s3 + $0x1e8] sm:$0xf]
  %v416 = vld [vmem:[%s3 + $0x1ec] sm:$0xff]
  %v417 = vld [vmem:[%s3 + $0x1f4] sm:$0xf]
  %v418 = vld [vmem:[%s3 + $0x1f8] sm:$0xff]
  %v419 = vld [vmem:[%s3 + $0x200] sm:$0xf]
  %v420 = vld [vmem:[%s3 + $0x204] sm:$0xff]
  %v421 = vld [vmem:[%s3 + $0x20c] sm:$0xf]
  %v422 = vld [vmem:[%s3 + $0x210] sm:$0xff]
  %v423 = vld [vmem:[%s3 + $0x218] sm:$0xf]
  %v424 = vld [vmem:[%s3 + $0x21c] sm:$0xff]
  %v425 = vld [vmem:[%s3 + $0x224] sm:$0xf]
  %v426 = vld [vmem:[%s3 + $0x228] sm:$0xff]
  %v427 = vld [vmem:[%s3 + $0x230] sm:$0xf]
  %v428 = vld [vmem:[%s3 + $0x234] sm:$0xff]
  %v429 = vld [vmem:[%s3 + $0x23c] sm:$0xf]
  %v430 = vld [vmem:[%s3 + $0x240] sm:$0xff]
  %v431 = vld [vmem:[%s3 + $0x248] sm:$0xf]
  %v432 = vld [vmem:[%s3 + $0x24c] sm:$0xff]
  %v433 = vld [vmem:[%s3 + $0x254] sm:$0xf]
  %v434 = vld [vmem:[%s3 + $0x258] sm:$0xff]
  %v435 = vld [vmem:[%s3 + $0x260] sm:$0xf]
  %v436 = vld [vmem:[%s3 + $0x264] sm:$0xff]
  %v437 = vld [vmem:[%s3 + $0x26c] sm:$0xf]
  %v438 = vld [vmem:[%s3 + $0x270] sm:$0xff]
  %v439 = vld [vmem:[%s3 + $0x278] sm:$0xf]
  %v440 = vld [vmem:[%s3 + $0x27c] sm:$0xff]
  %v441 = vld [vmem:[%s3 + $0x284] sm:$0xf]
  %v442 = vld [vmem:[%s3 + $0x288] sm:$0xff]
  %v443 = vld [vmem:[%s3 + $0x290] sm:$0xf]
  %v444 = vld [vmem:[%s3 + $0x294] sm:$0xff]
  %v445 = vld [vmem:[%s3 + $0x29c] sm:$0xf]
  %v446 = vld [vmem:[%s3 + $0x2a0] sm:$0xff]
  %v447 = vld [vmem:[%s3 + $0x2a8] sm:$0xf]
  %v448 = vld [vmem:[%s3 + $0x2ac] sm:$0xff]
  %v449 = vld [vmem:[%s3 + $0x2b4] sm:$0xf]
  %v450 = vld [vmem:[%s3 + $0x2b8] sm:$0xff]
  %v451 = vld [vmem:[%s3 + $0x2c0] sm:$0xf]
  %v452 = vld [vmem:[%s3 + $0x2c4] sm:$0xff]
  %v453 = vld [vmem:[%s3 + $0x2cc] sm:$0xf]
  %v454 = vld [vmem:[%s3 + $0x2d0] sm:$0xff]
  %v455 = vld [vmem:[%s3 + $0x2d8] sm:$0xf]
  %v456 = vld [vmem:[%s3 + $0x2dc] sm:$0xff]
  %v457 = vld [vmem:[%s3 + $0x2e4] sm:$0xf]
  %v458 = vld [vmem:[%s3 + $0x2e8] sm:$0xff]
  %v459 = vld [vmem:[%s3 + $0x2f0] sm:$0xf]
  %v460 = vld [vmem:[%s3 + $0x2f4] sm:$0xff]
  %v461 = vld [vmem:[%s3 + $0x2fc] sm:$0xf]
  %v462 = vld [vmem:[%s4] sm:$0x7]
  %v464 = vlaneseq
  %v465 = vshrl.u32 %v464, 7
  %v466 = vsub.s32 0, %v465
  %v467 = vrot.slane %v462, %v466
  %v468 = vlaneseq
  %v469 = vshrl.u32 %v468, 7
  %v470 = vsub.s32 1, %v469
  %v471 = vrot.slane %v462, %v470
  %v472 = vlaneseq
  %v473 = vshrl.u32 %v472, 7
  %v474 = vsub.s32 2, %v473
  %v475 = vrot.slane %v462, %v474
  %v607 = vunpack.c.l.b16 %v334
  %v608 = vunpack.c.h.b16 %v334
  %v609 = vunpack.c.l.b16 %v335
  %v610 = vunpack.c.l.b16 %v336
  %v611 = vunpack.c.h.b16 %v336
  %v612 = vunpack.c.l.b16 %v337
  %v613 = vunpack.c.l.b16 %v338
  %v614 = vunpack.c.h.b16 %v338
  %v615 = vunpack.c.l.b16 %v339
  %v616 = vunpack.c.l.b16 %v340
  %v617 = vunpack.c.h.b16 %v340
  %v618 = vunpack.c.l.b16 %v341
  %v619 = vunpack.c.l.b16 %v342
  %v620 = vunpack.c.h.b16 %v342
  %v621 = vunpack.c.l.b16 %v343
  %v622 = vunpack.c.l.b16 %v344
  %v623 = vunpack.c.h.b16 %v344
  %v624 = vunpack.c.l.b16 %v345
  %v625 = vunpack.c.l.b16 %v346
  %v626 = vunpack.c.h.b16 %v346
  %v627 = vunpack.c.l.b16 %v347
  %v628 = vunpack.c.l.b16 %v348
  %v629 = vunpack.c.h.b16 %v348
  %v630 = vunpack.c.l.b16 %v349
  %v631 = vunpack.c.l.b16 %v350
  %v632 = vunpack.c.h.b16 %v350
  %v633 = vunpack.c.l.b16 %v351
  %v634 = vunpack.c.l.b16 %v352
  %v635 = vunpack.c.h.b16 %v352
  %v636 = vunpack.c.l.b16 %v353
  %v637 = vunpack.c.l.b16 %v354
  %v638 = vunpack.c.h.b16 %v354
  %v639 = vunpack.c.l.b16 %v355
  %v640 = vunpack.c.l.b16 %v356
  %v641 = vunpack.c.h.b16 %v356
  %v642 = vunpack.c.l.b16 %v357
  %v643 = vunpack.c.l.b16 %v358
  %v644 = vunpack.c.h.b16 %v358
  %v645 = vunpack.c.l.b16 %v359
  %v646 = vunpack.c.l.b16 %v360
  %v647 = vunpack.c.h.b16 %v360
  %v648 = vunpack.c.l.b16 %v361
  %v649 = vunpack.c.l.b16 %v362
  %v650 = vunpack.c.h.b16 %v362
  %v651 = vunpack.c.l.b16 %v363
  %v652 = vunpack.c.l.b16 %v364
  %v653 = vunpack.c.h.b16 %v364
  %v654 = vunpack.c.l.b16 %v365
  %v655 = vunpack.c.l.b16 %v366
  %v656 = vunpack.c.h.b16 %v366
  %v657 = vunpack.c.l.b16 %v367
  %v658 = vunpack.c.l.b16 %v368
  %v659 = vunpack.c.h.b16 %v368
  %v660 = vunpack.c.l.b16 %v369
  %v661 = vunpack.c.l.b16 %v370
  %v662 = vunpack.c.h.b16 %v370
  %v663 = vunpack.c.l.b16 %v371
  %v664 = vunpack.c.l.b16 %v372
  %v665 = vunpack.c.h.b16 %v372
  %v666 = vunpack.c.l.b16 %v373
  %v667 = vunpack.c.l.b16 %v374
  %v668 = vunpack.c.h.b16 %v374
  %v669 = vunpack.c.l.b16 %v375
  %v670 = vunpack.c.l.b16 %v376
  %v671 = vunpack.c.h.b16 %v376
  %v672 = vunpack.c.l.b16 %v377
  %v673 = vunpack.c.l.b16 %v378
  %v674 = vunpack.c.h.b16 %v378
  %v675 = vunpack.c.l.b16 %v379
  %v676 = vunpack.c.l.b16 %v380
  %v677 = vunpack.c.h.b16 %v380
  %v678 = vunpack.c.l.b16 %v381
  %v679 = vunpack.c.l.b16 %v382
  %v680 = vunpack.c.h.b16 %v382
  %v681 = vunpack.c.l.b16 %v383
  %v682 = vunpack.c.l.b16 %v384
  %v683 = vunpack.c.h.b16 %v384
  %v684 = vunpack.c.l.b16 %v385
  %v685 = vunpack.c.l.b16 %v386
  %v686 = vunpack.c.h.b16 %v386
  %v687 = vunpack.c.l.b16 %v387
  %v688 = vunpack.c.l.b16 %v388
  %v689 = vunpack.c.h.b16 %v388
  %v690 = vunpack.c.l.b16 %v389
  %v691 = vunpack.c.l.b16 %v390
  %v692 = vunpack.c.h.b16 %v390
  %v693 = vunpack.c.l.b16 %v391
  %v694 = vunpack.c.l.b16 %v392
  %v695 = vunpack.c.h.b16 %v392
  %v696 = vunpack.c.l.b16 %v393
  %v697 = vunpack.c.l.b16 %v394
  %v698 = vunpack.c.h.b16 %v394
  %v699 = vunpack.c.l.b16 %v395
  %v700 = vunpack.c.l.b16 %v396
  %v701 = vunpack.c.h.b16 %v396
  %v702 = vunpack.c.l.b16 %v397
  %v703 = vunpack.c.l.b16 %v398
  %v704 = vunpack.c.h.b16 %v398
  %v705 = vunpack.c.l.b16 %v399
  %v706 = vunpack.c.l.b16 %v400
  %v707 = vunpack.c.h.b16 %v400
  %v708 = vunpack.c.l.b16 %v401
  %v709 = vunpack.c.l.b16 %v402
  %v710 = vunpack.c.h.b16 %v402
  %v711 = vunpack.c.l.b16 %v403
  %v712 = vunpack.c.l.b16 %v404
  %v713 = vunpack.c.h.b16 %v404
  %v714 = vunpack.c.l.b16 %v405
  %v715 = vunpack.c.l.b16 %v406
  %v716 = vunpack.c.h.b16 %v406
  %v717 = vunpack.c.l.b16 %v407
  %v718 = vunpack.c.l.b16 %v408
  %v719 = vunpack.c.h.b16 %v408
  %v720 = vunpack.c.l.b16 %v409
  %v721 = vunpack.c.l.b16 %v410
  %v722 = vunpack.c.h.b16 %v410
  %v723 = vunpack.c.l.b16 %v411
  %v724 = vunpack.c.l.b16 %v412
  %v725 = vunpack.c.h.b16 %v412
  %v726 = vunpack.c.l.b16 %v413
  %v727 = vunpack.c.l.b16 %v414
  %v728 = vunpack.c.h.b16 %v414
  %v729 = vunpack.c.l.b16 %v415
  %v730 = vunpack.c.l.b16 %v416
  %v731 = vunpack.c.h.b16 %v416
  %v732 = vunpack.c.l.b16 %v417
  %v733 = vunpack.c.l.b16 %v418
  %v734 = vunpack.c.h.b16 %v418
  %v735 = vunpack.c.l.b16 %v419
  %v736 = vunpack.c.l.b16 %v420
  %v737 = vunpack.c.h.b16 %v420
  %v738 = vunpack.c.l.b16 %v421
  %v739 = vunpack.c.l.b16 %v422
  %v740 = vunpack.c.h.b16 %v422
  %v741 = vunpack.c.l.b16 %v423
  %v742 = vunpack.c.l.b16 %v424
  %v743 = vunpack.c.h.b16 %v424
  %v744 = vunpack.c.l.b16 %v425
  %v745 = vunpack.c.l.b16 %v426
  %v746 = vunpack.c.h.b16 %v426
  %v747 = vunpack.c.l.b16 %v427
  %v748 = vunpack.c.l.b16 %v428
  %v749 = vunpack.c.h.b16 %v428
  %v750 = vunpack.c.l.b16 %v429
  %v751 = vunpack.c.l.b16 %v430
  %v752 = vunpack.c.h.b16 %v430
  %v753 = vunpack.c.l.b16 %v431
  %v754 = vunpack.c.l.b16 %v432
  %v755 = vunpack.c.h.b16 %v432
  %v756 = vunpack.c.l.b16 %v433
  %v757 = vunpack.c.l.b16 %v434
  %v758 = vunpack.c.h.b16 %v434
  %v759 = vunpack.c.l.b16 %v435
  %v760 = vunpack.c.l.b16 %v436
  %v761 = vunpack.c.h.b16 %v436
  %v762 = vunpack.c.l.b16 %v437
  %v763 = vunpack.c.l.b16 %v438
  %v764 = vunpack.c.h.b16 %v438
  %v765 = vunpack.c.l.b16 %v439
  %v766 = vunpack.c.l.b16 %v440
  %v767 = vunpack.c.h.b16 %v440
  %v768 = vunpack.c.l.b16 %v441
  %v769 = vunpack.c.l.b16 %v442
  %v770 = vunpack.c.h.b16 %v442
  %v771 = vunpack.c.l.b16 %v443
  %v772 = vunpack.c.l.b16 %v444
  %v773 = vunpack.c.h.b16 %v444
  %v774 = vunpack.c.l.b16 %v445
  %v775 = vunpack.c.l.b16 %v446
  %v776 = vunpack.c.h.b16 %v446
  %v777 = vunpack.c.l.b16 %v447
  %v778 = vunpack.c.l.b16 %v448
  %v779 = vunpack.c.h.b16 %v448
  %v780 = vunpack.c.l.b16 %v449
  %v781 = vunpack.c.l.b16 %v450
  %v782 = vunpack.c.h.b16 %v450
  %v783 = vunpack.c.l.b16 %v451
  %v784 = vunpack.c.l.b16 %v452
  %v785 = vunpack.c.h.b16 %v452
  %v786 = vunpack.c.l.b16 %v453
  %v787 = vunpack.c.l.b16 %v454
  %v788 = vunpack.c.h.b16 %v454
  %v789 = vunpack.c.l.b16 %v455
  %v790 = vunpack.c.l.b16 %v456
  %v791 = vunpack.c.h.b16 %v456
  %v792 = vunpack.c.l.b16 %v457
  %v793 = vunpack.c.l.b16 %v458
  %v794 = vunpack.c.h.b16 %v458
  %v795 = vunpack.c.l.b16 %v459
  %v796 = vunpack.c.l.b16 %v460
  %v797 = vunpack.c.h.b16 %v460
  %v798 = vunpack.c.l.b16 %v461
  %v799 = vpack.c.b16 %v610, %v607
  %v800 = vpack.c.b16 %v611, %v608
  %v801 = vpack.c.b16 %v612, %v609
  %v802 = vpack.c.b16 %v616, %v613
  %v803 = vpack.c.b16 %v617, %v614
  %v804 = vpack.c.b16 %v618, %v615
  %v805 = vpack.c.b16 %v622, %v619
  %v806 = vpack.c.b16 %v623, %v620
  %v807 = vpack.c.b16 %v624, %v621
  %v808 = vpack.c.b16 %v628, %v625
  %v809 = vpack.c.b16 %v629, %v626
  %v810 = vpack.c.b16 %v630, %v627
  %v811 = vpack.c.b16 %v634, %v631
  %v812 = vpack.c.b16 %v635, %v632
  %v813 = vpack.c.b16 %v636, %v633
  %v814 = vpack.c.b16 %v640, %v637
  %v815 = vpack.c.b16 %v641, %v638
  %v816 = vpack.c.b16 %v642, %v639
  %v817 = vpack.c.b16 %v646, %v643
  %v818 = vpack.c.b16 %v647, %v644
  %v819 = vpack.c.b16 %v648, %v645
  %v820 = vpack.c.b16 %v652, %v649
  %v821 = vpack.c.b16 %v653, %v650
  %v822 = vpack.c.b16 %v654, %v651
  %v823 = vpack.c.b16 %v658, %v655
  %v824 = vpack.c.b16 %v659, %v656
  %v825 = vpack.c.b16 %v660, %v657
  %v826 = vpack.c.b16 %v664, %v661
  %v827 = vpack.c.b16 %v665, %v662
  %v828 = vpack.c.b16 %v666, %v663
  %v829 = vpack.c.b16 %v670, %v667
  %v830 = vpack.c.b16 %v671, %v668
  %v831 = vpack.c.b16 %v672, %v669
  %v832 = vpack.c.b16 %v676, %v673
  %v833 = vpack.c.b16 %v677, %v674
  %v834 = vpack.c.b16 %v678, %v675
  %v835 = vpack.c.b16 %v682, %v679
  %v836 = vpack.c.b16 %v683, %v680
  %v837 = vpack.c.b16 %v684, %v681
  %v838 = vpack.c.b16 %v688, %v685
  %v839 = vpack.c.b16 %v689, %v686
  %v840 = vpack.c.b16 %v690, %v687
  %v841 = vpack.c.b16 %v694, %v691
  %v842 = vpack.c.b16 %v695, %v692
  %v843 = vpack.c.b16 %v696, %v693
  %v844 = vpack.c.b16 %v700, %v697
  %v845 = vpack.c.b16 %v701, %v698
  %v846 = vpack.c.b16 %v702, %v699
  %v847 = vpack.c.b16 %v706, %v703
  %v848 = vpack.c.b16 %v707, %v704
  %v849 = vpack.c.b16 %v708, %v705
  %v850 = vpack.c.b16 %v712, %v709
  %v851 = vpack.c.b16 %v713, %v710
  %v852 = vpack.c.b16 %v714, %v711
  %v853 = vpack.c.b16 %v718, %v715
  %v854 = vpack.c.b16 %v719, %v716
  %v855 = vpack.c.b16 %v720, %v717
  %v856 = vpack.c.b16 %v724, %v721
  %v857 = vpack.c.b16 %v725, %v722
  %v858 = vpack.c.b16 %v726, %v723
  %v859 = vpack.c.b16 %v730, %v727
  %v860 = vpack.c.b16 %v731, %v728
  %v861 = vpack.c.b16 %v732, %v729
  %v862 = vpack.c.b16 %v736, %v733
  %v863 = vpack.c.b16 %v737, %v734
  %v864 = vpack.c.b16 %v738, %v735
  %v865 = vpack.c.b16 %v742, %v739
  %v866 = vpack.c.b16 %v743, %v740
  %v867 = vpack.c.b16 %v744, %v741
  %v868 = vpack.c.b16 %v748, %v745
  %v869 = vpack.c.b16 %v749, %v746
  %v870 = vpack.c.b16 %v750, %v747
  %v871 = vpack.c.b16 %v754, %v751
  %v872 = vpack.c.b16 %v755, %v752
  %v873 = vpack.c.b16 %v756, %v753
  %v874 = vpack.c.b16 %v760, %v757
  %v875 = vpack.c.b16 %v761, %v758
  %v876 = vpack.c.b16 %v762, %v759
  %v877 = vpack.c.b16 %v766, %v763
  %v878 = vpack.c.b16 %v767, %v764
  %v879 = vpack.c.b16 %v768, %v765
  %v880 = vpack.c.b16 %v772, %v769
  %v881 = vpack.c.b16 %v773, %v770
  %v882 = vpack.c.b16 %v774, %v771
  %v883 = vpack.c.b16 %v778, %v775
  %v884 = vpack.c.b16 %v779, %v776
  %v885 = vpack.c.b16 %v780, %v777
  %v886 = vpack.c.b16 %v784, %v781
  %v887 = vpack.c.b16 %v785, %v782
  %v888 = vpack.c.b16 %v786, %v783
  %v889 = vpack.c.b16 %v790, %v787
  %v890 = vpack.c.b16 %v791, %v788
  %v891 = vpack.c.b16 %v792, %v789
  %v892 = vpack.c.b16 %v796, %v793
  %v893 = vpack.c.b16 %v797, %v794
  %v894 = vpack.c.b16 %v798, %v795
  %991 = vmatprep.subr.bf16.mxu0 %v800
  %992 = vmatpush1.bf16.msra.mxu0 %v799
  %993 = vmatprep.subr.bf16.mxu0 %v803
  %994 = vmatpush1.bf16.msra.mxu0 %v802
  %995 = vmatprep.subr.bf16.mxu0 %v806
  %996 = vmatpush1.bf16.msra.mxu0 %v805
  %997 = vmatprep.subr.bf16.mxu0 %v809
  %998 = vmatpush1.bf16.msra.mxu0 %v808
  %999 = vmatprep.subr.bf16.mxu0 %v812
  %1000 = vmatpush1.bf16.msra.mxu0 %v811
  %1001 = vmatprep.subr.bf16.mxu0 %v815
  %1002 = vmatpush1.bf16.msra.mxu0 %v814
  %1003 = vmatprep.subr.bf16.mxu0 %v818
  %1004 = vmatpush1.bf16.msra.mxu0 %v817
  %1005 = vmatprep.subr.bf16.mxu0 %v821
  %1006 = vmatpush1.bf16.msra.mxu0 %v820
  %1007 = vmatprep.subr.bf16.mxu0 %v824
  %1008 = vmatpush1.bf16.msra.mxu0 %v823
  %1009 = vmatprep.subr.bf16.mxu0 %v827
  %1010 = vmatpush1.bf16.msra.mxu0 %v826
  %1011 = vmatprep.subr.bf16.mxu0 %v830
  %1012 = vmatpush1.bf16.msra.mxu0 %v829
  %1013 = vmatprep.subr.bf16.mxu0 %v833
  %1014 = vmatpush1.bf16.msra.mxu0 %v832
  %1015 = vmatprep.subr.bf16.mxu0 %v836
  %1016 = vmatpush1.bf16.msra.mxu0 %v835
  %1017 = vmatprep.subr.bf16.mxu0 %v839
  %1018 = vmatpush1.bf16.msra.mxu0 %v838
  %1019 = vmatprep.subr.bf16.mxu0 %v842
  %1020 = vmatpush1.bf16.msra.mxu0 %v841
  %1021 = vmatprep.subr.bf16.mxu0 %v845
  %1022 = vmatpush1.bf16.msra.mxu0 %v844
  %1023 = vmatprep.mubr.bf16.mxu0 %v331
  %1024 = vmatmul.mubr.bf16.gmra.mrb[0].mxu0 %v330
  %v1025 = vpop.f32.mrb[0].mxu0
  %v1026 = vadd.f32 %v467, %v1025
  %v1027 = vpop.f32.mrb[0].mxu0
  %v1028 = vadd.f32 %v471, %v1027
  %v1029 = vpop.f32.mrb[0].mxu0
  %v1030 = vpop.f32.mrb[0].mxu0
  %1031 = vdwg.mxu0
  %1032 = vmatprep.subr.bf16.mxu0 %v848
  %1033 = vmatpush1.bf16.msra.mxu0 %v847
  %1034 = vmatprep.subr.bf16.mxu0 %v851
  %1035 = vmatpush1.bf16.msra.mxu0 %v850
  %1036 = vmatprep.subr.bf16.mxu0 %v854
  %1037 = vmatpush1.bf16.msra.mxu0 %v853
  %1038 = vmatprep.subr.bf16.mxu0 %v857
  %1039 = vmatpush1.bf16.msra.mxu0 %v856
  %1040 = vmatprep.subr.bf16.mxu0 %v860
  %1041 = vmatpush1.bf16.msra.mxu0 %v859
  %1042 = vmatprep.subr.bf16.mxu0 %v863
  %1043 = vmatpush1.bf16.msra.mxu0 %v862
  %1044 = vmatprep.subr.bf16.mxu0 %v866
  %1045 = vmatpush1.bf16.msra.mxu0 %v865
  %1046 = vmatprep.subr.bf16.mxu0 %v869
  %1047 = vmatpush1.bf16.msra.mxu0 %v868
  %1048 = vmatprep.subr.bf16.mxu0 %v872
  %1049 = vmatpush1.bf16.msra.mxu0 %v871
  %1050 = vmatprep.subr.bf16.mxu0 %v875
  %1051 = vmatpush1.bf16.msra.mxu0 %v874
  %1052 = vmatprep.subr.bf16.mxu0 %v878
  %1053 = vmatpush1.bf16.msra.mxu0 %v877
  %1054 = vmatprep.subr.bf16.mxu0 %v881
  %1055 = vmatpush1.bf16.msra.mxu0 %v880
  %1056 = vmatprep.subr.bf16.mxu0 %v884
  %1057 = vmatpush1.bf16.msra.mxu0 %v883
  %1058 = vmatprep.subr.bf16.mxu0 %v887
  %1059 = vmatpush1.bf16.msra.mxu0 %v886
  %1060 = vmatprep.subr.bf16.mxu0 %v890
  %1061 = vmatpush1.bf16.msra.mxu0 %v889
  %1062 = vmatprep.subr.bf16.mxu0 %v893
  %1063 = vmatpush1.bf16.msra.mxu0 %v892
  %1064 = vmatprep.mubr.bf16.mxu0 %v333
  %1065 = vmatmul.mubr.bf16.gmra.mrb[0].mxu0 %v332
  %v1066 = vpop.f32.mrb[0].mxu0
  %v1067 = vadd.f32 %v1026, %v1066
  %v1068 = vpop.f32.mrb[0].mxu0
  %v1069 = vadd.f32 %v1028, %v1068
  %v1070 = vpop.f32.mrb[0].mxu0
  %v1071 = vpop.f32.mrb[0].mxu0
  %1072 = vdwg.mxu0
  %1073 = vmatprep.subr.bf16.mxu0 0
  %1074 = vmatpush1.bf16.msra.mxu0 %v801
  %1075 = vmatprep.subr.bf16.mxu0 0
  %1076 = vmatpush1.bf16.msra.mxu0 %v804
  %1077 = vmatprep.subr.bf16.mxu0 0
  %1078 = vmatpush1.bf16.msra.mxu0 %v807
  %1079 = vmatprep.subr.bf16.mxu0 0
  %1080 = vmatpush1.bf16.msra.mxu0 %v810
  %1081 = vmatprep.subr.bf16.mxu0 0
  %1082 = vmatpush1.bf16.msra.mxu0 %v813
  %1083 = vmatprep.subr.bf16.mxu0 0
  %1084 = vmatpush1.bf16.msra.mxu0 %v816
  %1085 = vmatprep.subr.bf16.mxu0 0
  %1086 = vmatpush1.bf16.msra.mxu0 %v819
  %1087 = vmatprep.subr.bf16.mxu0 0
  %1088 = vmatpush1.bf16.msra.mxu0 %v822
  %1089 = vmatprep.subr.bf16.mxu0 0
  %1090 = vmatpush1.bf16.msra.mxu0 %v825
  %1091 = vmatprep.subr.bf16.mxu0 0
  %1092 = vmatpush1.bf16.msra.mxu0 %v828
  %1093 = vmatprep.subr.bf16.mxu0 0
  %1094 = vmatpush1.bf16.msra.mxu0 %v831
  %1095 = vmatprep.subr.bf16.mxu0 0
  %1096 = vmatpush1.bf16.msra.mxu0 %v834
  %1097 = vmatprep.subr.bf16.mxu0 0
  %1098 = vmatpush1.bf16.msra.mxu0 %v837
  %1099 = vmatprep.subr.bf16.mxu0 0
  %1100 = vmatpush1.bf16.msra.mxu0 %v840
  %1101 = vmatprep.subr.bf16.mxu0 0
  %1102 = vmatpush1.bf16.msra.mxu0 %v843
  %1103 = vmatprep.subr.bf16.mxu0 0
  %1104 = vmatpush1.bf16.msra.mxu0 %v846
  %1105 = vmatprep.mubr.bf16.mxu0 %v331
  %1106 = vmatmul.mubr.bf16.gmra.mrb[0].mxu0 %v330
  %v1107 = vpop.f32.mrb[0].mxu0
  %v1108 = vadd.f32 %v475, %v1107
  %v1109 = vpop.f32.mrb[0].mxu0
  %v1110 = vpop.f32.mrb[0].mxu0
  %v1111 = vpop.f32.mrb[0].mxu0
  %1112 = vdwg.mxu0
  %1113 = vmatprep.subr.bf16.mxu0 0
  %1114 = vmatpush1.bf16.msra.mxu0 %v849
  %1115 = vmatprep.subr.bf16.mxu0 0
  %1116 = vmatpush1.bf16.msra.mxu0 %v852
  %1117 = vmatprep.subr.bf16.mxu0 0
  %1118 = vmatpush1.bf16.msra.mxu0 %v855
  %1119 = vmatprep.subr.bf16.mxu0 0
  %1120 = vmatpush1.bf16.msra.mxu0 %v858
  %1121 = vmatprep.subr.bf16.mxu0 0
  %1122 = vmatpush1.bf16.msra.mxu0 %v861
  %1123 = vmatprep.subr.bf16.mxu0 0
  %1124 = vmatpush1.bf16.msra.mxu0 %v864
  %1125 = vmatprep.subr.bf16.mxu0 0
  %1126 = vmatpush1.bf16.msra.mxu0 %v867
  %1127 = vmatprep.subr.bf16.mxu0 0
  %1128 = vmatpush1.bf16.msra.mxu0 %v870
  %1129 = vmatprep.subr.bf16.mxu0 0
  %1130 = vmatpush1.bf16.msra.mxu0 %v873
  %1131 = vmatprep.subr.bf16.mxu0 0
  %1132 = vmatpush1.bf16.msra.mxu0 %v876
  %1133 = vmatprep.subr.bf16.mxu0 0
  %1134 = vmatpush1.bf16.msra.mxu0 %v879
  %1135 = vmatprep.subr.bf16.mxu0 0
  %1136 = vmatpush1.bf16.msra.mxu0 %v882
  %1137 = vmatprep.subr.bf16.mxu0 0
  %1138 = vmatpush1.bf16.msra.mxu0 %v885
  %1139 = vmatprep.subr.bf16.mxu0 0
  %1140 = vmatpush1.bf16.msra.mxu0 %v888
  %1141 = vmatprep.subr.bf16.mxu0 0
  %1142 = vmatpush1.bf16.msra.mxu0 %v891
  %1143 = vmatprep.subr.bf16.mxu0 0
  %1144 = vmatpush1.bf16.msra.mxu0 %v894
  %1145 = vmatprep.mubr.bf16.mxu0 %v333
  %1146 = vmatmul.mubr.bf16.gmra.mrb[0].mxu0 %v332
  %v1147 = vpop.f32.mrb[0].mxu0
  %v1148 = vadd.f32 %v1108, %v1147
  %v1149 = vpop.f32.mrb[0].mxu0
  %v1150 = vpop.f32.mrb[0].mxu0
  %v1151 = vpop.f32.mrb[0].mxu0
  %1152 = vdwg.mxu0
  %v1153 = vmax.f32 %v1067, 0.0
  %v1154 = vmax.f32 %v1069, 0.0
  %v1155 = vmax.f32 %v1148, 0.0
  %v1156 = vld [vmem:[%s5] sm:$0x7]
  %v1158 = vlaneseq
  %v1159 = vshrl.u32 %v1158, 7
  %v1160 = vsub.s32 0, %v1159
  %v1161 = vrot.slane %v1156, %v1160
  %v1162 = vlaneseq
  %v1163 = vshrl.u32 %v1162, 7
  %v1164 = vsub.s32 1, %v1163
  %v1165 = vrot.slane %v1156, %v1164
  %v1166 = vlaneseq
  %v1167 = vshrl.u32 %v1166, 7
  %v1168 = vsub.s32 2, %v1167
  %v1169 = vrot.slane %v1156, %v1168
  %v1173 = vmul.f32 %v1153, %v1161
  %v1174 = vmul.f32 %v1154, %v1165
  %v1175 = vmul.f32 %v1155, %v1169
  %v1176 = vadd.f32 %v1173, %v1174
  %v1177 = vadd.f32 %v1176, %v1175
  %1178 = vadd.xlane.f32.xlu0 %v1177
  %v1179 = vpop.xlane.xlu0 %1178
  %v1180 = vld [vmem:[#allocation2] sm:$0x1]
  %v1182 = vlaneseq
  %v1183 = vshrl.u32 %v1182, 7
  %v1184 = vsub.s32 0, %v1183
  %v1185 = vrot.slane %v1180, %v1184
  %v1187 = vadd.f32 %v1179, %v1185
  %v1188 = vtanh.pop %v1187
  %1190 = vset.pattern.permute.xlu0 0
  %1191 = vperm.xlu0 %1190, %v1188
  %v1192 = vpop.permute.xlu0 %1191
  %1194 = vst [vmem:[%s7] sm:$0xff] %v1192
  // Predicated region
  $region30: #{actor_forward.1} parent=0 // pred_check
    _
  $region31: #{actor_forward.1} parent=0 // pred_check_branch
    %1196 = sbr.rel (0) target = $region33
  $region32: #{actor_forward.1} parent=0 // pred_region
    _
  $region33: #{actor_forward.1} parent=0 // pred_fallthru
    _
  // Predicated region
  $region34: #{actor_forward.1} parent=0 // pred_check
    _
  $region35: #{actor_forward.1} parent=0 // pred_check_branch
    %1198 = sbr.rel (0) target = $region37
  $region36: #{actor_forward.1} parent=0 // pred_region
    _
  $region37: #{actor_forward.1} parent=0 // pred_fallthru
    _

</llo_original>
